<compile_context>
chip_gen: v7x
topology: tpu7x:2x2x1
jax: 0.10.0
libtpu: 0.0.40
codegen_flags: <defaults>
</compile_context>

<pallas_src>
from functools import partial

import jax
import jax.numpy as jnp
from jax.experimental import pallas as pl
from jax.experimental.pallas import tpu as pltpu


def _dma_copy_kernel(x_ref, o_ref, sem):
    # Single HBM->HBM DMA of the whole slab: no VMEM staging, no per-element
    # in-core work (keeps v5e's single vector-store slot out of the picture).
    cp = pltpu.make_async_copy(x_ref, o_ref, sem)
    cp.start()
    cp.wait()


@partial(jax.jit, static_argnums=1)
def view_as_heads(x, target_shape):
    """Equivalent of torch.Tensor.view(target_shape) for a contiguous (B, S, H) input."""
    b, s, h = x.shape
    tb, ts, nh, hd = target_shape
    assert (tb, ts) == (b, s) and nh * hd == h, "view shape mismatch"

    rows = b * s
    # Lane-dense 2-D slab (rows x hidden); metadata-only reshape.
    x2d = x.reshape(rows, h)

    nbytes = rows * h * jnp.dtype(x.dtype).itemsize

    # Ungridded single invocation: one DMA descriptor, no pipeline steps.
    # TODO(synk): for much larger (rows, H) slabs, grid over rows with
    # 512-1024-row tiles and dimension_semantics=("parallel",) (v7x: 2 TCs,
    # 64 MiB VMEM) instead of this whole-slab DMA.
    out2d = pl.pallas_call(
        _dma_copy_kernel,
        out_shape=jax.ShapeDtypeStruct((rows, h), x.dtype),
        in_specs=[pl.BlockSpec(memory_space=pl.ANY)],
        out_specs=pl.BlockSpec(memory_space=pl.ANY),
        scratch_shapes=[pltpu.SemaphoreType.DMA],
        cost_estimate=pl.CostEstimate(
            flops=0, transcendentals=0, bytes_accessed=2 * nbytes),
        compiler_params=pltpu.CompilerParams(has_side_effects=True),
    )(x2d)

    # Pure metadata reshape == torch .view (row-major, contiguous).
    return out2d.reshape(target_shape)


if __name__ == "__main__":
    key = jax.random.PRNGKey(0)
    # Shapes implied directly by the module (already small: ~1.1 MiB f32).
    x217 = jax.random.normal(key, (1, 384, 768), dtype=jnp.float32)
    x230 = (1, 384, 12, 64)

    # Reference computed up-front (pure-JAX reshape == torch .view).
    ref = x217.reshape(x230)

    out = view_as_heads(x217, x230)
    out = jax.block_until_ready(out)

    assert out.shape == x230
    assert jnp.array_equal(out, ref)

    print("KERNEL_OK")
</pallas_src>

<mosaic_0001>
module attributes {stable_mosaic.version = 11 : i64} {
  func.func @_dma_copy_kernel(%arg0: memref<384x768xf32, #tpu.memory_space<any>>, %arg1: memref<384x768xf32, #tpu.memory_space<any>>, %arg2: memref<!tpu.dma_semaphore, #tpu.memory_space<semaphore_mem>>) attributes {dimension_semantics = [], scalar_prefetch = 0 : i64, scratch_operands = 1 : i64, tpu.core_type = #tpu.core_type<tc>} {
    tpu.enqueue_dma source(%arg0 : memref<384x768xf32, #tpu.memory_space<any>>) target(%arg1 : memref<384x768xf32, #tpu.memory_space<any>>) target_semaphore(%arg2 : memref<!tpu.dma_semaphore, #tpu.memory_space<semaphore_mem>>)
    tpu.wait_dma2 semaphore(%arg2 : memref<!tpu.dma_semaphore, #tpu.memory_space<semaphore_mem>>) src(%arg0 : memref<384x768xf32, #tpu.memory_space<any>>) dst(%arg1 : memref<384x768xf32, #tpu.memory_space<any>>)
    return
  }
}

</mosaic_0001>

<llo_original>
// kernel: view_as_heads.1
$region0: #{view_as_heads.1}
  #allocation0 [shape = 'u32[]', space=smem, size = 0x4, offset = 0x4, fixed_abs, tag = 'smem constant byte address 0x4 - core index']
  #allocation1 [shape = 'u32[144,128]{1,0:T(1,128)}', space=vmem, size = 0x12000, scoped, tag = 'internal scratch']
  #allocation2 [shape = 's32[1]{0}', space=sflag, size = 0x4, scoped, tag = 'scratch operand']
  #allocation3 [shape = 's32[]', space=sflag, size = 0x4, offset = 0, fixed_abs, tag = 'sflag constant byte address 0x0 - dummy sync flag']
  #allocation4 [shape = 's32[]', space=sflag, size = 0x4, offset = 0, fixed_abs, tag = 'sflag constant byte address 0x0 - dummy sync flag']
  #allocation5 [shape = 'u32[]', space=smem, size = 0x4, offset = 0x44, fixed_abs, tag = 'smem constant byte address 0x44 - assertion arg 0']
  #allocation6 [shape = 'u32[]', space=smem, size = 0x4, offset = 0x48, fixed_abs, tag = 'smem constant byte address 0x48 - assertion arg 1']
  %s0 = inlined_call_operand.hbm [shape: f32[384,768], index: 0, kind: input, shape index: {}]
  %s1 = inlined_call_operand.vmem [shape: f32[384,768], index: 1, kind: output, shape index: {}]
  %s2 = sld [smem:[#allocation0]]
  $region6: #{view_as_heads.1} parent=0
    _
  %s4 = ssub.s32 1, %s2
  %s5 = scalar_select 0, %s4, %s2
  // Predicated region
  $region2: #{view_as_heads.1} parent=0 // pred_check
    _
  $region3: #{view_as_heads.1} parent=0 // pred_check_branch
    %7 = sbr.rel target = $region5
  $region4: #{view_as_heads.1} parent=0 // pred_region
    %8 = sst [smem:[#allocation5]] [#allocation4]
    %9 = sst [smem:[#allocation6]] [#allocation3]
  $region5: #{view_as_heads.1} parent=0 // pred_fallthru
    _
  %11 = shalt.err (0)
  %s13 = sshll.u32 %s1, 4
  %s14 = int_to_ptr.vmem [resolvable:$true] %s13
  %16 = dma.hbm_to_vmem [thread:$0]  %s0, 36864, %s14, [#allocation2]
  %s17 = smul.u32 8, 48
  %s18 = smul.u32 %s17, 6
  %s19 = sshll.u32 %s18, 4
  %20 = dma.done [#allocation2], %s19
  %21 = vsyncmov [#allocation2]
  %s22 = vpop.sfrf %21
  %p23 = scmp.eq.s32.totalorder %s22, 0
  %p24 = pneg %p23
  %26 = shalt.err (%p24)

</llo_original>
